<compile_context>
chip_gen: v6e
topology: v6e:2x2x1
jax: 0.10.0
libtpu: 0.0.40
codegen_flags: <defaults>
</compile_context>

<pallas_src>
import functools
from typing import List, Optional, Tuple, Union

import jax
import jax.numpy as jnp
from jax.experimental import pallas as pl
from jax.experimental.pallas import tpu as pltpu

LANE = 128
_TRANSCENDENTAL_ACTS = ("tanh", "sigmoid", "gelu")


def _cdiv(a: int, b: int) -> int:
    return (a + b - 1) // b


def _round_up(x: int, m: int) -> int:
    return _cdiv(x, m) * m


def _pad2d(a, rows: int, cols: int):
    r, c = a.shape
    if r == rows and c == cols:
        return a
    return jnp.pad(a, ((0, rows - r), (0, cols - c)))


def _apply_activation(y, act: Optional[str]):
    if act is None:
        return y
    if act == "relu":
        return jnp.maximum(y, 0.0)
    if act == "tanh":
        return jnp.tanh(y)
    if act == "sigmoid":
        return jax.nn.sigmoid(y)
    if act == "gelu":
        return jax.nn.gelu(y)
    raise ValueError(f"unknown activation: {act}")


def _hw_config():
    """Generation-aware VMEM budget / tile caps (v5e, v6e, v7x)."""
    kind = ""
    try:
        kind = jax.devices()[0].device_kind.lower()
    except Exception:
        pass
    vmem_bytes = None
    try:
        vmem_bytes = int(pltpu.get_tpu_info().vmem_capacity_bytes)
    except Exception:
        vmem_bytes = None
    if not vmem_bytes or vmem_bytes <= 0:
        vmem_bytes = 64 * 1024 * 1024 if "v7" in kind else 128 * 1024 * 1024
    is_v7 = "v7" in kind
    is_v5e = ("v5 lite" in kind) or ("v5e" in kind)
    return {
        "kind": kind,
        "vmem_bytes": vmem_bytes,
        "is_v7": is_v7,
        # v5e: smaller MXU / lower HBM BW -> smaller batch tiles.
        "tm_max": 256 if is_v5e else 512,
        # Leave headroom for compiler scratch; scales with the physical VMEM.
        "vmem_limit": min(vmem_bytes - 8 * 1024 * 1024, int(vmem_bytes * 0.85)),
        "fused_budget": int(vmem_bytes * 0.72),
    }


# ---------------------------------------------------------------------------
# Fused whole-MLP kernel (all layers + lane-aligned concatenated output heads)
# ---------------------------------------------------------------------------
def _fused_mlp_kernel(x_ref, *refs, num_hidden, hidden_activation, head_slabs,
                      compute_dtype):
    # refs = (w0, b0, w1, b1, ..., w_out, b_out, o_ref)
    o_ref = refs[-1]
    params = refs[:-1]

    h = x_ref[...].astype(compute_dtype)                  # in-kernel bf16 cast
    for l in range(num_hidden):
        w = params[2 * l][...]                            # (Kprev, Kl_pad), bf16
        b = params[2 * l + 1][...]                        # (1, Kl_pad), f32
        y = jnp.dot(h, w, preferred_element_type=jnp.float32) + b
        y = _apply_activation(y, hidden_activation)
        h = y.astype(compute_dtype)

    w = params[2 * num_hidden][...]                       # (Kh_pad, Npad)
    b = params[2 * num_hidden + 1][...]                   # (1, Npad), f32
    y = jnp.dot(h, w, preferred_element_type=jnp.float32) + b

    if all(act is None for (_, _, act) in head_slabs):
        o_ref[...] = y.astype(o_ref.dtype)
    else:
        # Per-head activation on a static, lane-aligned slab (width % 128 == 0)
        # so each store stays a full lane-dense vst and transcendental work is
        # limited to the head's (padded) width.
        for (ps, pw, act) in head_slabs:
            slab = _apply_activation(y[:, ps:ps + pw], act)
            o_ref[:, ps:ps + pw] = slab.astype(o_ref.dtype)


def _fused_mlp_forward(x, params, *, tm, num_hidden, hidden_activation,
                       head_slabs, n_pad, out_dtype, compute_dtype,
                       vmem_limit, single_buffer_weights):
    m_pad, k_cols = x.shape
    grid = (m_pad // tm,)

    def _weight_spec(shape):
        # Constant index_map -> fetched once; Buffered(1) drops the unused
        # second pipeline buffer (halves weight VMEM on the fused path).
        if single_buffer_weights:
            return pl.BlockSpec(shape, lambda i: (0, 0),
                                pipeline_mode=pl.Buffered(1))
        return pl.BlockSpec(shape, lambda i: (0, 0))

    in_specs = [pl.BlockSpec((tm, k_cols), lambda i: (i, 0))]
    for p in params:
        in_specs.append(_weight_spec(p.shape))

    # Advisory cost estimate for XLA's scheduler.
    flops = 0
    for l in range(num_hidden + 1):
        r, c = params[2 * l].shape
        flops += 2 * m_pad * r * c
    transcendentals = 0
    if hidden_activation in _TRANSCENDENTAL_ACTS:
        for l in range(num_hidden):
            transcendentals += m_pad * params[2 * l].shape[1]
    for (_, pw, act) in head_slabs:
        if act in _TRANSCENDENTAL_ACTS:
            transcendentals += m_pad * pw
    bytes_accessed = (x.size * x.dtype.itemsize
                      + sum(int(p.size) * p.dtype.itemsize for p in params)
                      + m_pad * n_pad * jnp.dtype(out_dtype).itemsize)

    kernel = functools.partial(
        _fused_mlp_kernel,
        num_hidden=num_hidden,
        hidden_activation=hidden_activation,
        head_slabs=head_slabs,
        compute_dtype=compute_dtype,
    )
    return pl.pallas_call(
        kernel,
        out_shape=jax.ShapeDtypeStruct((m_pad, n_pad), out_dtype),
        grid_spec=pltpu.PrefetchScalarGridSpec(
            num_scalar_prefetch=0,
            grid=grid,
            in_specs=in_specs,
            out_specs=pl.BlockSpec((tm, n_pad), lambda i: (i, 0)),
        ),
        compiler_params=pltpu.CompilerParams(
            dimension_semantics=("parallel",),
            vmem_limit_bytes=vmem_limit,
        ),
        cost_estimate=pl.CostEstimate(
            flops=int(flops),
            transcendentals=int(transcendentals),
            bytes_accessed=int(bytes_accessed),
        ),
    )(x, *params)


# ---------------------------------------------------------------------------
# Fallback: per-layer linear kernel, (N, M, K)-tiled with f32 accumulator.
# Grid order keeps a weight tile resident across batch steps; K is tiled so
# huge layers stay within the per-generation VMEM budget.
# ---------------------------------------------------------------------------
def _linear_kernel(x_ref, w_ref, b_ref, o_ref, acc_ref, *, activation):
    kk = pl.program_id(2)

    @pl.when(kk == 0)
    def _():
        acc_ref[...] = jnp.zeros_like(acc_ref)

    acc_ref[...] += jnp.dot(x_ref[...].astype(w_ref.dtype), w_ref[...],
                            preferred_element_type=jnp.float32)

    @pl.when(kk == pl.num_programs(2) - 1)
    def _():
        y = acc_ref[...] + b_ref[...]
        y = _apply_activation(y, activation)
        o_ref[...] = y.astype(o_ref.dtype)


def _pallas_linear(x, w, b, *, activation, tm, out_dtype, vmem_limit,
                   tn_max=512, tk_max=1024):
    m_pad, k_dim = x.shape
    _, n_pad = w.shape

    tn = min(n_pad, tn_max)
    while n_pad % tn:            # n_pad and tn are multiples of 128
        tn -= LANE
    if k_dim % LANE:
        tk = k_dim               # non-128-multiple K only for the raw input layer
    else:
        tk = min(k_dim, tk_max)
        while k_dim % tk:
            tk -= LANE

    grid = (n_pad // tn, m_pad // tm, k_dim // tk)

    flops = 2 * m_pad * k_dim * n_pad
    transcendentals = m_pad * n_pad if activation in _TRANSCENDENTAL_ACTS else 0
    bytes_accessed = (x.size * x.dtype.itemsize + w.size * w.dtype.itemsize
                      + b.size * b.dtype.itemsize
                      + m_pad * n_pad * jnp.dtype(out_dtype).itemsize)

    return pl.pallas_call(
        functools.partial(_linear_kernel, activation=activation),
        out_shape=jax.ShapeDtypeStruct((m_pad, n_pad), out_dtype),
        grid_spec=pltpu.PrefetchScalarGridSpec(
            num_scalar_prefetch=0,
            grid=grid,
            in_specs=[
                pl.BlockSpec((tm, tk), lambda n, m, kk: (m, kk)),
                pl.BlockSpec((tk, tn), lambda n, m, kk: (kk, n)),
                pl.BlockSpec((1, tn), lambda n, m, kk: (0, n)),
            ],
            out_specs=pl.BlockSpec((tm, tn), lambda n, m, kk: (m, n)),
            scratch_shapes=[pltpu.VMEM((tm, tn), jnp.float32)],
        ),
        compiler_params=pltpu.CompilerParams(
            dimension_semantics=("parallel", "parallel", "arbitrary"),
            vmem_limit_bytes=vmem_limit,
        ),
        cost_estimate=pl.CostEstimate(
            flops=int(flops),
            transcendentals=int(transcendentals),
            bytes_accessed=int(bytes_accessed),
        ),
    )(x, w, b)


# ---------------------------------------------------------------------------
# MLP module (mirrors PyTorch MLP semantics)
# ---------------------------------------------------------------------------
class PallasMLP:
    def __init__(
        self,
        in_dims: List[int],
        hidden_dims: List[int],
        out_dims: List[int],
        *,
        hidden_activation: str = "relu",
        out_activations: Optional[List[Optional[str]]] = None,
        zero_init_biases: bool = False,
        init_std: Optional[float] = None,
        zero_init_output_weights: Optional[List[bool]] = None,
        zero_init_output_biases: Optional[List[bool]] = None,
        compute_dtype=jnp.bfloat16,
        output_dtype=jnp.float32,
        key: jax.Array,
    ):
        self.in_dims = in_dims
        self.hidden_dims = hidden_dims
        self.out_dims = out_dims
        self.hidden_activation = hidden_activation
        self.out_activations = out_activations
        self.compute_dtype = compute_dtype
        self.output_dtype = output_dtype
        zero_init_output_weights = zero_init_output_weights or [False] * len(out_dims)
        zero_init_output_biases = zero_init_output_biases or [False] * len(out_dims)
        if out_activations is not None:
            assert len(out_dims) == len(out_activations)

        std = init_std if init_std is not None else 0.02
        self._hw = _hw_config()

        # hidden layers (f32 master params)
        self.hidden_params = []
        prev = sum(in_dims)
        for dim in hidden_dims:
            key, kw, kb = jax.random.split(key, 3)
            w = std * jax.random.normal(kw, (prev, dim), jnp.float32)
            if zero_init_biases:
                b = jnp.zeros((dim,), jnp.float32)
            else:
                b = std * jax.random.normal(kb, (dim,), jnp.float32)
            self.hidden_params.append((w, b))
            prev = dim

        # output heads
        head_in = sum(in_dims) if len(hidden_dims) == 0 else hidden_dims[-1]
        self.out_params = []
        for i, dim in enumerate(out_dims):
            key, kw, kb = jax.random.split(key, 3)
            if zero_init_output_weights[i]:
                w = jnp.zeros((head_in, dim), jnp.float32)
            else:
                w = std * jax.random.normal(kw, (head_in, dim), jnp.float32)
            if zero_init_output_biases[i]:
                b = jnp.zeros((dim,), jnp.float32)
            else:
                b = std * jax.random.normal(kb, (dim,), jnp.float32)
            self.out_params.append((w, b))

        self._build_padded_params()

    # -- lane-padded, compute-dtype parameter chain for the kernels ---------
    def _build_padded_params(self):
        cd = self.compute_dtype
        self._k_in = sum(self.in_dims)

        # Hidden chain: first layer keeps the true K rows (x is not K-padded);
        # subsequent layers pad rows to the previous layer's padded width.
        chain = []
        prev_rows = self._k_in
        for (w, b) in self.hidden_params:
            dim = w.shape[1]
            dim_pad = _round_up(dim, LANE)
            wp = _pad2d(w, prev_rows, dim_pad).astype(cd)
            bp = _pad2d(b.reshape(1, -1), 1, dim_pad).astype(jnp.float32)
            chain.append((wp, bp))
            prev_rows = dim_pad
        self._chain = chain

        # Output heads fused as lane-aligned slabs: each head padded to a
        # multiple of 128 lanes before concatenation.
        head_rows = prev_rows
        w_blocks, b_blocks, slabs = [], [], []
        off = 0
        for i, d in enumerate(self.out_dims):
            d_pad = _round_up(d, LANE)
            w, b = self.out_params[i]
            w_blocks.append(_pad2d(w, head_rows, d_pad))
            b_blocks.append(_pad2d(b.reshape(1, -1), 1, d_pad))
            act = None if self.out_activations is None else self.out_activations[i]
            slabs.append((off, d_pad, d, act))   # (pad_start, pad_width, true_d, act)
            off += d_pad
        self._n_pad = off
        self._w_out = jnp.concatenate(w_blocks, axis=1).astype(cd)
        self._b_out = jnp.concatenate(b_blocks, axis=1).astype(jnp.float32)
        self._head_slabs = tuple(slabs)

    def _flat_params(self):
        params = []
        for (w, b) in self._chain:
            params += [w, b]
        params += [self._w_out, self._b_out]
        return params

    def _fused_vmem_bytes(self, tm: int, k_in: int, params) -> int:
        total = 2 * tm * k_in * 4                       # x tile (src dtype <= f32), 2 bufs
        for p in params:
            total += int(p.size) * p.dtype.itemsize     # single-buffered (Buffered(1))
        total += 2 * tm * self._n_pad * jnp.dtype(self.output_dtype).itemsize
        widest = max([p.shape[-1] for p in params] + [k_in])
        total += 4 * tm * widest * 4                    # headroom for intermediates
        return total

    # -- forward -------------------------------------------------------------
    def __call__(self, *x_: jax.Array, force_fallback: bool = False
                 ) -> Union[jax.Array, Tuple[jax.Array, ...]]:
        # torch.concat([*x_], dim=1)
        x = jnp.concatenate(list(x_), axis=1) if len(x_) > 1 else jnp.asarray(x_[0])
        M, K = x.shape
        assert K == self._k_in
        hw = self._hw

        # bf16 packs (16,128) per vreg -> align the batch tile to 16.
        tm_align = 16 if jnp.dtype(self.compute_dtype).itemsize == 2 else 8
        tm = min(_round_up(M, tm_align), hw["tm_max"])
        if hw["is_v7"] and _cdiv(M, tm) == 1 and tm >= 2 * tm_align:
            # Ensure >=2 batch grid steps so both v7x TensorCores get work.
            half = _round_up(_cdiv(M, 2), tm_align)
            if half < tm:
                tm = half
        m_pad = _round_up(M, tm)
        if m_pad != M:
            x = jnp.pad(x, ((0, m_pad - M), (0, 0)))   # pad only M; K stays true

        params = self._flat_params()
        fused = (not force_fallback) and (
            self._fused_vmem_bytes(tm, K, params) <= hw["fused_budget"])

        if fused:
            kwargs = dict(
                tm=tm,
                num_hidden=len(self._chain),
                hidden_activation=self.hidden_activation,
                head_slabs=tuple((ps, pw, act) for (ps, pw, _, act) in self._head_slabs),
                n_pad=self._n_pad,
                out_dtype=self.output_dtype,
                compute_dtype=self.compute_dtype,
                vmem_limit=hw["vmem_limit"],
            )
            try:
                y = _fused_mlp_forward(x, params, single_buffer_weights=True, **kwargs)
            except Exception:
                # TODO(synk): drop this retry once pl.Buffered(1) is verified on all gens.
                y = _fused_mlp_forward(x, params, single_buffer_weights=False, **kwargs)
        else:
            h = x
            for (w, b) in self._chain:
                # Hidden activations emitted directly in compute_dtype (bf16):
                # halves inter-layer HBM writeback and removes an external cast.
                h = _pallas_linear(h, w, b, activation=self.hidden_activation,
                                   tm=tm, out_dtype=self.compute_dtype,
                                   vmem_limit=hw["vmem_limit"])
            y = _pallas_linear(h, self._w_out, self._b_out, activation=None,
                               tm=tm, out_dtype=self.output_dtype,
                               vmem_limit=hw["vmem_limit"])

        outputs = []
        for (ps, pw, d, act) in self._head_slabs:
            o = y[:M, ps:ps + d]
            if not fused:                 # fused path applied head acts in-kernel
                o = _apply_activation(o.astype(jnp.float32), act).astype(self.output_dtype)
            outputs.append(o)
        outputs = tuple(outputs)
        return outputs if len(outputs) > 1 else outputs[0]

    # -- pure-JAX reference (f32) for validation ------------------------------
    def reference_forward(self, *x_):
        x = jnp.concatenate(list(x_), axis=1) if len(x_) > 1 else jnp.asarray(x_[0])
        h = x
        for (w, b) in self.hidden_params:
            h = _apply_activation(h @ w + b, self.hidden_activation)
        outs = []
        for i, (w, b) in enumerate(self.out_params):
            act = None if self.out_activations is None else self.out_activations[i]
            outs.append(_apply_activation(h @ w + b, act))
        outs = tuple(outs)
        return outs if len(outs) > 1 else outs[0]


# ---------------------------------------------------------------------------
# Demo / smoke test
# ---------------------------------------------------------------------------
if __name__ == "__main__":
    key = jax.random.PRNGKey(0)
    k_x0, k_x1, k_params = jax.random.split(key, 3)

    batch = 16
    in_dims = [4, 12]          # two input tensors, concatenated along dim=1
    hidden_dims = [32, 32]
    out_dims = [8, 16]

    mlp = PallasMLP(
        in_dims,
        hidden_dims,
        out_dims,
        hidden_activation="relu",
        out_activations=["tanh", None],
        zero_init_biases=True,
        init_std=0.02,
        key=k_params,
    )

    x0 = jax.random.normal(k_x0, (batch, in_dims[0]), jnp.float32)
    x1 = jax.random.normal(k_x1, (batch, in_dims[1]), jnp.float32)

    ref = mlp.reference_forward(x0, x1)
    tol = 5e-3 * max(1, len(hidden_dims))   # bf16 matmuls, f32 accumulation

    # Fused whole-MLP kernel path.
    out = jax.block_until_ready(mlp(x0, x1))
    assert isinstance(out, tuple) and len(out) == 2
    assert out[0].shape == (batch, out_dims[0])
    assert out[1].shape == (batch, out_dims[1])
    for o, r in zip(out, ref):
        err = float(jnp.max(jnp.abs(o.astype(jnp.float32) - r)))
        assert err < tol, f"fused path: max abs error too large: {err}"

    # Per-layer fallback path (used for models exceeding the VMEM budget).
    out_fb = jax.block_until_ready(mlp(x0, x1, force_fallback=True))
    for o, r in zip(out_fb, ref):
        err = float(jnp.max(jnp.abs(o.astype(jnp.float32) - r)))
        assert err < tol, f"fallback path: max abs error too large: {err}"

    print("KERNEL_OK")
</pallas_src>

<mosaic_0001>
module attributes {stable_mosaic.version = 11 : i64} {
  func.func @_fused_mlp_kernel(%arg0: i32, %arg1: memref<16x16xf32, #tpu.memory_space<vmem>>, %arg2: memref<16x128xbf16, #tpu.memory_space<vmem>>, %arg3: memref<1x128xf32, #tpu.memory_space<vmem>>, %arg4: memref<128x128xbf16, #tpu.memory_space<vmem>>, %arg5: memref<1x128xf32, #tpu.memory_space<vmem>>, %arg6: memref<128x256xbf16, #tpu.memory_space<vmem>>, %arg7: memref<1x256xf32, #tpu.memory_space<vmem>>, %arg8: memref<16x256xf32, #tpu.memory_space<vmem>>) attributes {dimension_semantics = [#tpu.dimension_semantics<parallel>], iteration_bounds = array<i64: 1>, scalar_prefetch = 0 : i64, scratch_operands = 0 : i64, tpu.core_type = #tpu.core_type<tc>, window_params = [{transform_indices = @transform_0, window_bounds = array<i64: 16, 16>}, {pipeline_mode = #tpu.pipeline_mode<synchronous>, transform_indices = @transform_1, window_bounds = array<i64: 16, 128>}, {pipeline_mode = #tpu.pipeline_mode<synchronous>, transform_indices = @transform_2, window_bounds = array<i64: 1, 128>}, {pipeline_mode = #tpu.pipeline_mode<synchronous>, transform_indices = @transform_3, window_bounds = array<i64: 128, 128>}, {pipeline_mode = #tpu.pipeline_mode<synchronous>, transform_indices = @transform_4, window_bounds = array<i64: 1, 128>}, {pipeline_mode = #tpu.pipeline_mode<synchronous>, transform_indices = @transform_5, window_bounds = array<i64: 128, 256>}, {pipeline_mode = #tpu.pipeline_mode<synchronous>, transform_indices = @transform_6, window_bounds = array<i64: 1, 256>}, {transform_indices = @transform_7, window_bounds = array<i64: 16, 256>}]} {
    %c0 = arith.constant 0 : index
    %c0_0 = arith.constant 0 : index
    %0 = vector.load %arg1[%c0, %c0_0] : memref<16x16xf32, #tpu.memory_space<vmem>>, vector<16x16xf32>
    %1 = arith.truncf %0 : vector<16x16xf32> to vector<16x16xbf16>
    %c0_1 = arith.constant 0 : index
    %c0_2 = arith.constant 0 : index
    %2 = vector.load %arg2[%c0_1, %c0_2] : memref<16x128xbf16, #tpu.memory_space<vmem>>, vector<16x128xbf16>
    %c0_3 = arith.constant 0 : index
    %c0_4 = arith.constant 0 : index
    %3 = vector.load %arg3[%c0_3, %c0_4] : memref<1x128xf32, #tpu.memory_space<vmem>>, vector<1x128xf32>
    %cst = arith.constant dense<0.000000e+00> : vector<16x128xf32>
    %4 = tpu.matmul %1, %2, %cst {dimension_numbers = #tpu.dot_dimension_numbers<[1], [0], [0], [1], [0, 0, 1, 1], [], []>} : vector<16x16xbf16>, vector<16x128xbf16>, vector<16x128xf32> -> vector<16x128xf32>
    %5 = vector.broadcast %3 : vector<1x128xf32> to vector<16x128xf32>
    %6 = arith.addf %4, %5 : vector<16x128xf32>
    %cst_5 = arith.constant 0.000000e+00 : f32
    %7 = vector.broadcast %cst_5 : f32 to vector<16x128xf32>
    %8 = arith.maximumf %6, %7 : vector<16x128xf32>
    %9 = arith.truncf %8 : vector<16x128xf32> to vector<16x128xbf16>
    %c0_6 = arith.constant 0 : index
    %c0_7 = arith.constant 0 : index
    %10 = vector.load %arg4[%c0_6, %c0_7] : memref<128x128xbf16, #tpu.memory_space<vmem>>, vector<128x128xbf16>
    %c0_8 = arith.constant 0 : index
    %c0_9 = arith.constant 0 : index
    %11 = vector.load %arg5[%c0_8, %c0_9] : memref<1x128xf32, #tpu.memory_space<vmem>>, vector<1x128xf32>
    %cst_10 = arith.constant dense<0.000000e+00> : vector<16x128xf32>
    %12 = tpu.matmul %9, %10, %cst_10 {dimension_numbers = #tpu.dot_dimension_numbers<[1], [0], [0], [1], [0, 0, 1, 1], [], []>} : vector<16x128xbf16>, vector<128x128xbf16>, vector<16x128xf32> -> vector<16x128xf32>
    %13 = vector.broadcast %11 : vector<1x128xf32> to vector<16x128xf32>
    %14 = arith.addf %12, %13 : vector<16x128xf32>
    %cst_11 = arith.constant 0.000000e+00 : f32
    %15 = vector.broadcast %cst_11 : f32 to vector<16x128xf32>
    %16 = arith.maximumf %14, %15 : vector<16x128xf32>
    %17 = arith.truncf %16 : vector<16x128xf32> to vector<16x128xbf16>
    %c0_12 = arith.constant 0 : index
    %c0_13 = arith.constant 0 : index
    %18 = vector.load %arg6[%c0_12, %c0_13] : memref<128x256xbf16, #tpu.memory_space<vmem>>, vector<128x256xbf16>
    %c0_14 = arith.constant 0 : index
    %c0_15 = arith.constant 0 : index
    %19 = vector.load %arg7[%c0_14, %c0_15] : memref<1x256xf32, #tpu.memory_space<vmem>>, vector<1x256xf32>
    %cst_16 = arith.constant dense<0.000000e+00> : vector<16x256xf32>
    %20 = tpu.matmul %17, %18, %cst_16 {dimension_numbers = #tpu.dot_dimension_numbers<[1], [0], [0], [1], [0, 0, 1, 1], [], []>} : vector<16x128xbf16>, vector<128x256xbf16>, vector<16x256xf32> -> vector<16x256xf32>
    %21 = vector.broadcast %19 : vector<1x256xf32> to vector<16x256xf32>
    %22 = arith.addf %20, %21 : vector<16x256xf32>
    %23 = vector.extract_strided_slice %22 {offsets = [0, 0], sizes = [16, 128], strides = [1, 1]} : vector<16x256xf32> to vector<16x128xf32>
    %24 = math.tanh %23 : vector<16x128xf32>
    %c0_17 = arith.constant 0 : index
    %c0_18 = arith.constant 0 : index
    %25 = vector.load %arg8[%c0_17, %c0_18] : memref<16x256xf32, #tpu.memory_space<vmem>>, vector<16x128xf32>
    tpu.vector_store %arg8[%c0_17, %c0_18], %24 {strides = array<i32>} : memref<16x256xf32, #tpu.memory_space<vmem>>, vector<16x128xf32>,
    %26 = vector.extract_strided_slice %22 {offsets = [0, 128], sizes = [16, 128], strides = [1, 1]} : vector<16x256xf32> to vector<16x128xf32>
    %c0_19 = arith.constant 0 : index
    %c128 = arith.constant 128 : index
    %27 = vector.load %arg8[%c0_19, %c128] : memref<16x256xf32, #tpu.memory_space<vmem>>, vector<16x128xf32>
    tpu.vector_store %arg8[%c0_19, %c128], %26 {strides = array<i32>} : memref<16x256xf32, #tpu.memory_space<vmem>>, vector<16x128xf32>,
    return
  }
  func.func @transform_0(%arg0: i32) -> (i32, i32) {
    %c0_i32 = arith.constant 0 : i32
    %c0_i32_0 = arith.constant 0 : i32
    return %arg0, %c0_i32 : i32, i32
  }
  func.func @transform_1(%arg0: i32) -> (i32, i32) {
    %c0_i32 = arith.constant 0 : i32
    %c0_i32_0 = arith.constant 0 : i32
    %c0_i32_1 = arith.constant 0 : i32
    return %c0_i32, %c0_i32_0 : i32, i32
  }
  func.func @transform_2(%arg0: i32) -> (i32, i32) {
    %c0_i32 = arith.constant 0 : i32
    %c0_i32_0 = arith.constant 0 : i32
    %c0_i32_1 = arith.constant 0 : i32
    return %c0_i32, %c0_i32_0 : i32, i32
  }
  func.func @transform_3(%arg0: i32) -> (i32, i32) {
    %c0_i32 = arith.constant 0 : i32
    %c0_i32_0 = arith.constant 0 : i32
    %c0_i32_1 = arith.constant 0 : i32
    return %c0_i32, %c0_i32_0 : i32, i32
  }
  func.func @transform_4(%arg0: i32) -> (i32, i32) {
    %c0_i32 = arith.constant 0 : i32
    %c0_i32_0 = arith.constant 0 : i32
    %c0_i32_1 = arith.constant 0 : i32
    return %c0_i32, %c0_i32_0 : i32, i32
  }
  func.func @transform_5(%arg0: i32) -> (i32, i32) {
    %c0_i32 = arith.constant 0 : i32
    %c0_i32_0 = arith.constant 0 : i32
    %c0_i32_1 = arith.constant 0 : i32
    return %c0_i32, %c0_i32_0 : i32, i32
  }
  func.func @transform_6(%arg0: i32) -> (i32, i32) {
    %c0_i32 = arith.constant 0 : i32
    %c0_i32_0 = arith.constant 0 : i32
    %c0_i32_1 = arith.constant 0 : i32
    return %c0_i32, %c0_i32_0 : i32, i32
  }
  func.func @transform_7(%arg0: i32) -> (i32, i32) {
    %c0_i32 = arith.constant 0 : i32
    %c0_i32_0 = arith.constant 0 : i32
    return %arg0, %c0_i32 : i32, i32
  }
}

module attributes {stable_mosaic.version = 11 : i64} {
  func.func @_fused_mlp_kernel(%arg0: i32, %arg1: memref<16x16xf32, #tpu.memory_space<vmem>>, %arg2: memref<16x128xbf16, #tpu.memory_space<vmem>>, %arg3: memref<1x128xf32, #tpu.memory_space<vmem>>, %arg4: memref<128x128xbf16, #tpu.memory_space<vmem>>, %arg5: memref<1x128xf32, #tpu.memory_space<vmem>>, %arg6: memref<128x256xbf16, #tpu.memory_space<vmem>>, %arg7: memref<1x256xf32, #tpu.memory_space<vmem>>, %arg8: memref<16x256xf32, #tpu.memory_space<vmem>>) attributes {dimension_semantics = [#tpu.dimension_semantics<parallel>], iteration_bounds = array<i64: 1>, scalar_prefetch = 0 : i64, scratch_operands = 0 : i64, tpu.core_type = #tpu.core_type<tc>, window_params = [{transform_indices = @transform_0, window_bounds = array<i64: 16, 16>}, {pipeline_mode = #tpu.pipeline_mode<synchronous>, transform_indices = @transform_1, window_bounds = array<i64: 16, 128>}, {pipeline_mode = #tpu.pipeline_mode<synchronous>, transform_indices = @transform_2, window_bounds = array<i64: 1, 128>}, {pipeline_mode = #tpu.pipeline_mode<synchronous>, transform_indices = @transform_3, window_bounds = array<i64: 128, 128>}, {pipeline_mode = #tpu.pipeline_mode<synchronous>, transform_indices = @transform_4, window_bounds = array<i64: 1, 128>}, {pipeline_mode = #tpu.pipeline_mode<synchronous>, transform_indices = @transform_5, window_bounds = array<i64: 128, 256>}, {pipeline_mode = #tpu.pipeline_mode<synchronous>, transform_indices = @transform_6, window_bounds = array<i64: 1, 256>}, {transform_indices = @transform_7, window_bounds = array<i64: 16, 256>}]} {
    %c0 = arith.constant 0 : index
    %c0_0 = arith.constant 0 : index
    %0 = vector.load %arg1[%c0, %c0_0] : memref<16x16xf32, #tpu.memory_space<vmem>>, vector<16x16xf32>
    %1 = arith.truncf %0 : vector<16x16xf32> to vector<16x16xbf16>
    %c0_1 = arith.constant 0 : index
    %c0_2 = arith.constant 0 : index
    %2 = vector.load %arg2[%c0_1, %c0_2] : memref<16x128xbf16, #tpu.memory_space<vmem>>, vector<16x128xbf16>
    %c0_3 = arith.constant 0 : index
    %c0_4 = arith.constant 0 : index
    %3 = vector.load %arg3[%c0_3, %c0_4] : memref<1x128xf32, #tpu.memory_space<vmem>>, vector<1x128xf32>
    %cst = arith.constant dense<0.000000e+00> : vector<16x128xf32>
    %4 = tpu.matmul %1, %2, %cst {dimension_numbers = #tpu.dot_dimension_numbers<[1], [0], [0], [1], [0, 0, 1, 1], [], []>} : vector<16x16xbf16>, vector<16x128xbf16>, vector<16x128xf32> -> vector<16x128xf32>
    %5 = vector.broadcast %3 : vector<1x128xf32> to vector<16x128xf32>
    %6 = arith.addf %4, %5 : vector<16x128xf32>
    %cst_5 = arith.constant 0.000000e+00 : f32
    %7 = vector.broadcast %cst_5 : f32 to vector<16x128xf32>
    %8 = arith.maximumf %6, %7 : vector<16x128xf32>
    %9 = arith.truncf %8 : vector<16x128xf32> to vector<16x128xbf16>
    %c0_6 = arith.constant 0 : index
    %c0_7 = arith.constant 0 : index
    %10 = vector.load %arg4[%c0_6, %c0_7] : memref<128x128xbf16, #tpu.memory_space<vmem>>, vector<128x128xbf16>
    %c0_8 = arith.constant 0 : index
    %c0_9 = arith.constant 0 : index
    %11 = vector.load %arg5[%c0_8, %c0_9] : memref<1x128xf32, #tpu.memory_space<vmem>>, vector<1x128xf32>
    %cst_10 = arith.constant dense<0.000000e+00> : vector<16x128xf32>
    %12 = tpu.matmul %9, %10, %cst_10 {dimension_numbers = #tpu.dot_dimension_numbers<[1], [0], [0], [1], [0, 0, 1, 1], [], []>} : vector<16x128xbf16>, vector<128x128xbf16>, vector<16x128xf32> -> vector<16x128xf32>
    %13 = vector.broadcast %11 : vector<1x128xf32> to vector<16x128xf32>
    %14 = arith.addf %12, %13 : vector<16x128xf32>
    %cst_11 = arith.constant 0.000000e+00 : f32
    %15 = vector.broadcast %cst_11 : f32 to vector<16x128xf32>
    %16 = arith.maximumf %14, %15 : vector<16x128xf32>
    %17 = arith.truncf %16 : vector<16x128xf32> to vector<16x128xbf16>
    %c0_12 = arith.constant 0 : index
    %c0_13 = arith.constant 0 : index
    %18 = vector.load %arg6[%c0_12, %c0_13] : memref<128x256xbf16, #tpu.memory_space<vmem>>, vector<128x256xbf16>
    %c0_14 = arith.constant 0 : index
    %c0_15 = arith.constant 0 : index
    %19 = vector.load %arg7[%c0_14, %c0_15] : memref<1x256xf32, #tpu.memory_space<vmem>>, vector<1x256xf32>
    %cst_16 = arith.constant dense<0.000000e+00> : vector<16x256xf32>
    %20 = tpu.matmul %17, %18, %cst_16 {dimension_numbers = #tpu.dot_dimension_numbers<[1], [0], [0], [1], [0, 0, 1, 1], [], []>} : vector<16x128xbf16>, vector<128x256xbf16>, vector<16x256xf32> -> vector<16x256xf32>
    %21 = vector.broadcast %19 : vector<1x256xf32> to vector<16x256xf32>
    %22 = arith.addf %20, %21 : vector<16x256xf32>
    %23 = vector.extract_strided_slice %22 {offsets = [0, 0], sizes = [16, 128], strides = [1, 1]} : vector<16x256xf32> to vector<16x128xf32>
    %24 = math.tanh %23 : vector<16x128xf32>
    %c0_17 = arith.constant 0 : index
    %c0_18 = arith.constant 0 : index
    %25 = vector.load %arg8[%c0_17, %c0_18] : memref<16x256xf32, #tpu.memory_space<vmem>>, vector<16x128xf32>
    tpu.vector_store %arg8[%c0_17, %c0_18], %24 {strides = array<i32>} : memref<16x256xf32, #tpu.memory_space<vmem>>, vector<16x128xf32>,
    %26 = vector.extract_strided_slice %22 {offsets = [0, 128], sizes = [16, 128], strides = [1, 1]} : vector<16x256xf32> to vector<16x128xf32>
    %c0_19 = arith.constant 0 : index
    %c128 = arith.constant 128 : index
    %27 = vector.load %arg8[%c0_19, %c128] : memref<16x256xf32, #tpu.memory_space<vmem>>, vector<16x128xf32>
    tpu.vector_store %arg8[%c0_19, %c128], %26 {strides = array<i32>} : memref<16x256xf32, #tpu.memory_space<vmem>>, vector<16x128xf32>,
    return
  }
  func.func @transform_0(%arg0: i32) -> (i32, i32) {
    %c0_i32 = arith.constant 0 : i32
    %c0_i32_0 = arith.constant 0 : i32
    return %arg0, %c0_i32 : i32, i32
  }
  func.func @transform_1(%arg0: i32) -> (i32, i32) {
    %c0_i32 = arith.constant 0 : i32
    %c0_i32_0 = arith.constant 0 : i32
    %c0_i32_1 = arith.constant 0 : i32
    return %c0_i32, %c0_i32_0 : i32, i32
  }
  func.func @transform_2(%arg0: i32) -> (i32, i32) {
    %c0_i32 = arith.constant 0 : i32
    %c0_i32_0 = arith.constant 0 : i32
    %c0_i32_1 = arith.constant 0 : i32
    return %c0_i32, %c0_i32_0 : i32, i32
  }
  func.func @transform_3(%arg0: i32) -> (i32, i32) {
    %c0_i32 = arith.constant 0 : i32
    %c0_i32_0 = arith.constant 0 : i32
    %c0_i32_1 = arith.constant 0 : i32
    return %c0_i32, %c0_i32_0 : i32, i32
  }
  func.func @transform_4(%arg0: i32) -> (i32, i32) {
    %c0_i32 = arith.constant 0 : i32
    %c0_i32_0 = arith.constant 0 : i32
    %c0_i32_1 = arith.constant 0 : i32
    return %c0_i32, %c0_i32_0 : i32, i32
  }
  func.func @transform_5(%arg0: i32) -> (i32, i32) {
    %c0_i32 = arith.constant 0 : i32
    %c0_i32_0 = arith.constant 0 : i32
    %c0_i32_1 = arith.constant 0 : i32
    return %c0_i32, %c0_i32_0 : i32, i32
  }
  func.func @transform_6(%arg0: i32) -> (i32, i32) {
    %c0_i32 = arith.constant 0 : i32
    %c0_i32_0 = arith.constant 0 : i32
    %c0_i32_1 = arith.constant 0 : i32
    return %c0_i32, %c0_i32_0 : i32, i32
  }
  func.func @transform_7(%arg0: i32) -> (i32, i32) {
    %c0_i32 = arith.constant 0 : i32
    %c0_i32_0 = arith.constant 0 : i32
    return %arg0, %c0_i32 : i32, i32
  }
}

</mosaic_0001>

<llo_original>
// kernel: tpu_custom_call.1
$region0: #{tpu_custom_call.1}
  #allocation0 [shape = 'u32[]', space=smem, size = 0x4, offset = 0x4, fixed_abs, tag = 'smem constant byte address 0x4 - core index']
  #allocation1 [shape = 'u32[144,128]{1,0:T(1,128)}', space=vmem, size = 0x12000, scoped, tag = 'internal scratch']
  %s0 = inlined_call_operand.hbm [shape: f32[16,16], index: 0, kind: input, shape index: {}]
  %s1 = inlined_call_operand.hbm [shape: bf16[16,128], index: 1, kind: input, shape index: {}]
  %s2 = inlined_call_operand.vmem [shape: f32[1,128], index: 2, kind: input, shape index: {}]
  %s3 = inlined_call_operand.hbm [shape: bf16[128,128], index: 3, kind: input, shape index: {}]
  %s4 = inlined_call_operand.vmem [shape: f32[1,128], index: 4, kind: input, shape index: {}]
  %s5 = inlined_call_operand.hbm [shape: bf16[128,256], index: 5, kind: input, shape index: {}]
  %s6 = inlined_call_operand.vmem [shape: f32[1,256], index: 6, kind: input, shape index: {}]
  %s7 = inlined_call_operand.hbm [shape: f32[16,256], index: 7, kind: output, shape index: {}]
  %s8 = sld [smem:[#allocation0]]
  $region54: #{tpu_custom_call.1} parent=0
    _
  %s10 = ssub.s32 1, %s8
  %s11 = scalar_select 0, %s10, %s8
  $region1: #{tpu_custom_call.1} parent=0
    #allocation2 [shape = 'u8[8192]{0}', space=vmem, size = 0x2000, scoped, tag = 'input window, operand 0, single buffered']
    #allocation3 [shape = 's32[1]{0}', space=sflag, size = 0x4, scoped, tag = 'scoped memory for tpu_custom_call.1']
    #allocation4 [shape = 's32[1]{0}', space=sflag, size = 0x4, scoped, tag = 'scoped memory for tpu_custom_call.1']
    #allocation5 [shape = 'u8[4096]{0}', space=vmem, size = 0x1000, scoped, tag = 'input window, operand 1, single buffered']
    #allocation6 [shape = 's32[1]{0}', space=sflag, size = 0x4, scoped, tag = 'scoped memory for tpu_custom_call.1']
    #allocation7 [shape = 'u8[32768]{0}', space=vmem, size = 0x8000, scoped, tag = 'input window, operand 3, single buffered']
    #allocation8 [shape = 'u8[65536]{0}', space=vmem, size = 0x10000, scoped, tag = 'input window, operand 5, single buffered']
    #allocation9 [shape = 's32[1]{0}', space=sflag, size = 0x4, scoped, tag = 'scoped memory for tpu_custom_call.1']
    #allocation10 [shape = 'u8[16384]{0}', space=vmem, size = 0x4000, scoped, tag = 'output window, operand 0, single buffered']
    %12 = vsyncpa [#allocation3], 0
    %13 = vsyncpa [#allocation6], 0
    %14 = vsyncpa [#allocation9], 0
    %15 = vsyncpa [#allocation4], 0
    // Predicated region
    $region2: #{tpu_custom_call.1} parent=1 // pred_check
      _
    $region3: #{tpu_custom_call.1} parent=1 // pred_check_branch
      %17 = sbr.rel (0) target = $region5
    $region4: #{tpu_custom_call.1} parent=1 // pred_region
      %s19 = ssub.s32 256, 256
      %20 = vsyncadd [#allocation3], %s19
      %s21 = sshll.u32 [#allocation2], 4
      %s22 = int_to_ptr.vmem [resolvable:$true] %s21
      %27 = dma.hbm_to_vmem [thread:$0]  %s0, 256, %s22, [#allocation3], 128, 128, 8
    $region5: #{tpu_custom_call.1} parent=1 // pred_fallthru
      _
    // Predicated region
    $region6: #{tpu_custom_call.1} parent=1 // pred_check
      _
    $region7: #{tpu_custom_call.1} parent=1 // pred_check_branch
      %29 = sbr.rel (0) target = $region9
    $region8: #{tpu_custom_call.1} parent=1 // pred_region
      %s31 = ssub.s32 128, 128
      %32 = vsyncadd [#allocation6], %s31
      %s33 = sshll.u32 [#allocation5], 4
      %s34 = int_to_ptr.vmem [resolvable:$true] %s33
      %39 = dma.hbm_to_vmem [thread:$0]  %s1, 128, %s34, [#allocation6], 64, 64, 4
    $region9: #{tpu_custom_call.1} parent=1 // pred_fallthru
      _
    // Predicated region
    $region10: #{tpu_custom_call.1} parent=1 // pred_check
      _
    $region11: #{tpu_custom_call.1} parent=1 // pred_check_branch
      %41 = sbr.rel (0) target = $region13
    $region12: #{tpu_custom_call.1} parent=1 // pred_region
      _
    $region13: #{tpu_custom_call.1} parent=1 // pred_fallthru
      _
    // Predicated region
    $region14: #{tpu_custom_call.1} parent=1 // pred_check
      _
    $region15: #{tpu_custom_call.1} parent=1 // pred_check_branch
      %43 = sbr.rel (0) target = $region17
    $region16: #{tpu_custom_call.1} parent=1 // pred_region
      %s45 = ssub.s32 1024, 1024
      %46 = vsyncadd [#allocation6], %s45
      %s47 = sshll.u32 [#allocation7], 4
      %s48 = int_to_ptr.vmem [resolvable:$true] %s47
      %53 = dma.hbm_to_vmem [thread:$0]  %s3, 1024, %s48, [#allocation6], 64, 64, 4
    $region17: #{tpu_custom_call.1} parent=1 // pred_fallthru
      _
    // Predicated region
    $region18: #{tpu_custom_call.1} parent=1 // pred_check
      _
    $region19: #{tpu_custom_call.1} parent=1 // pred_check_branch
      %55 = sbr.rel (0) target = $region21
    $region20: #{tpu_custom_call.1} parent=1 // pred_region
      _
    $region21: #{tpu_custom_call.1} parent=1 // pred_fallthru
      _
    // Predicated region
    $region22: #{tpu_custom_call.1} parent=1 // pred_check
      _
    $region23: #{tpu_custom_call.1} parent=1 // pred_check_branch
      %57 = sbr.rel (0) target = $region25
    $region24: #{tpu_custom_call.1} parent=1 // pred_region
      %s59 = ssub.s32 2048, 2048
      %60 = vsyncadd [#allocation9], %s59
      %s61 = sshll.u32 [#allocation8], 4
      %s62 = int_to_ptr.vmem [resolvable:$true] %s61
      %67 = dma.hbm_to_vmem [thread:$0]  %s5, 2048, %s62, [#allocation9], 128, 128, 8
    $region25: #{tpu_custom_call.1} parent=1 // pred_fallthru
      _
    // Predicated region
    $region26: #{tpu_custom_call.1} parent=1 // pred_check
      _
    $region27: #{tpu_custom_call.1} parent=1 // pred_check_branch
      %69 = sbr.rel (0) target = $region29
    $region28: #{tpu_custom_call.1} parent=1 // pred_region
      _
    $region29: #{tpu_custom_call.1} parent=1 // pred_fallthru
      _
    // Predicated region
    $region30: #{tpu_custom_call.1} parent=1 // pred_check
      _
    $region31: #{tpu_custom_call.1} parent=1 // pred_check_branch
      %71 = sbr.rel (0) target = $region33
    $region32: #{tpu_custom_call.1} parent=1 // pred_region
      %72 = dma.done [#allocation3], 256
    $region33: #{tpu_custom_call.1} parent=1 // pred_fallthru
      _
    // Predicated region
    $region34: #{tpu_custom_call.1} parent=1 // pred_check
      _
    $region35: #{tpu_custom_call.1} parent=1 // pred_check_branch
      %74 = sbr.rel (0) target = $region37
    $region36: #{tpu_custom_call.1} parent=1 // pred_region
      %75 = dma.done [#allocation6], 128
    $region37: #{tpu_custom_call.1} parent=1 // pred_fallthru
      _
    // Predicated region
    $region38: #{tpu_custom_call.1} parent=1 // pred_check
      _
    $region39: #{tpu_custom_call.1} parent=1 // pred_check_branch
      %77 = sbr.rel (0) target = $region41
    $region40: #{tpu_custom_call.1} parent=1 // pred_region
      %78 = dma.done [#allocation6], 1024
    $region41: #{tpu_custom_call.1} parent=1 // pred_fallthru
      _
    // Predicated region
    $region42: #{tpu_custom_call.1} parent=1 // pred_check
      _
    $region43: #{tpu_custom_call.1} parent=1 // pred_check_branch
      %80 = sbr.rel (0) target = $region45
    $region44: #{tpu_custom_call.1} parent=1 // pred_region
      %81 = dma.done [#allocation9], 2048
    $region45: #{tpu_custom_call.1} parent=1 // pred_fallthru
      _
    %v83 = vld [vmem:[#allocation2] sm:$0xff]
    %v84 = vld [vmem:[#allocation2 + $0x8] sm:$0xff]
    %v85 = vpack.c.bf16 %v84, %v83
    %v86 = vld [vmem:[#allocation5] sm:$0xf]
    %v87 = vld [vmem:[#allocation5 + $0x4] sm:$0xf]
    %v88 = vld [vmem:[%s2] sm:$0x1]
    %v90 = vlaneseq
    %v91 = vshrl.u32 %v90, 7
    %v92 = vsub.s32 0, %v91
    %v93 = vrot.slane %v88, %v92
    %v97 = vunpack.c.l.b16 %v86
    %v98 = vunpack.c.l.b16 %v87
    %v99 = vpack.c.b16 %v98, %v97
    %vm101 = vcmask 130048
    %v103 = vsel %vm101, %v85, 0
    %105 = vmatprep.subr.bf16.mxu0 0
    %106 = vmatpush1.bf16.msra.mxu0 0
    %107 = vmatprep.subr.bf16.mxu0 0
    %108 = vmatpush1.bf16.msra.mxu0 0
    %109 = vmatprep.subr.bf16.mxu0 0
    %110 = vmatpush1.bf16.msra.mxu0 0
    %111 = vmatprep.subr.bf16.mxu0 0
    %112 = vmatpush1.bf16.msra.mxu0 0
    %113 = vmatprep.subr.bf16.mxu0 0
    %114 = vmatpush1.bf16.msra.mxu0 0
    %115 = vmatprep.subr.bf16.mxu0 0
    %116 = vmatpush1.bf16.msra.mxu0 0
    %117 = vmatprep.subr.bf16.mxu0 0
    %118 = vmatpush1.bf16.msra.mxu0 0
    %119 = vmatprep.subr.bf16.mxu0 0
    %120 = vmatpush1.bf16.msra.mxu0 %v99
    %121 = vmatprep.subr.bf16.mxu0 0
    %122 = vmatpush2.bf16.msra.mxu0 0
    %123 = vmatprep.subr.bf16.mxu0 0
    %124 = vmatpush2.bf16.msra.mxu0 0
    %125 = vmatprep.subr.bf16.mxu0 0
    %126 = vmatpush2.bf16.msra.mxu0 0
    %127 = vmatprep.subr.bf16.mxu0 0
    %128 = vmatpush2.bf16.msra.mxu0 0
    %129 = vmatprep.subr.bf16.mxu0 0
    %130 = vmatpush2.bf16.msra.mxu0 0
    %131 = vmatprep.subr.bf16.mxu0 0
    %132 = vmatpush2.bf16.msra.mxu0 0
    %133 = vmatprep.subr.bf16.mxu0 0
    %134 = vmatpush2.bf16.msra.mxu0 0
    %135 = vmatprep.subr.bf16.mxu0 0
    %136 = vmatpush2.bf16.msra.mxu0 0
    %137 = vmatprep.mubr.bf16.mxu0 0
    %138 = vmatmul.mubr.bf16.gmra.mxu0 %v103
    %v139 = vpop.f32.mrf.mxu0
    %v140 = vadd.f32 %v93, %v139
    %v141 = vpop.f32.mrf.mxu0
    %v142 = vpop.f32.mrf.mxu0
    %v143 = vadd.f32 %v93, %v142
    %v144 = vpop.f32.mrf.mxu0
    %145 = vdwg.mxu0
    %v146 = vmax.f32 %v140, 0.0
    %v147 = vmax.f32 %v143, 0.0
    %v148 = vpack.c.bf16 %v147, %v146
    %v149 = vld [vmem:[#allocation7] sm:$0xf]
    %v150 = vld [vmem:[#allocation7 + $0x4] sm:$0xf]
    %v151 = vld [vmem:[#allocation7 + $0x8] sm:$0xf]
    %v152 = vld [vmem:[#allocation7 + $0xc] sm:$0xf]
    %v153 = vld [vmem:[#allocation7 + $0x10] sm:$0xf]
    %v154 = vld [vmem:[#allocation7 + $0x14] sm:$0xf]
    %v155 = vld [vmem:[#allocation7 + $0x18] sm:$0xf]
    %v156 = vld [vmem:[#allocation7 + $0x1c] sm:$0xf]
    %v157 = vld [vmem:[#allocation7 + $0x20] sm:$0xf]
    %v158 = vld [vmem:[#allocation7 + $0x24] sm:$0xf]
    %v159 = vld [vmem:[#allocation7 + $0x28] sm:$0xf]
    %v160 = vld [vmem:[#allocation7 + $0x2c] sm:$0xf]
    %v161 = vld [vmem:[#allocation7 + $0x30] sm:$0xf]
    %v162 = vld [vmem:[#allocation7 + $0x34] sm:$0xf]
    %v163 = vld [vmem:[#allocation7 + $0x38] sm:$0xf]
    %v164 = vld [vmem:[#allocation7 + $0x3c] sm:$0xf]
    %v165 = vld [vmem:[%s4] sm:$0x1]
    %v167 = vlaneseq
    %v168 = vshrl.u32 %v167, 7
    %v169 = vsub.s32 0, %v168
    %v170 = vrot.slane %v165, %v169
    %v188 = vunpack.c.l.b16 %v149
    %v189 = vunpack.c.l.b16 %v150
    %v190 = vunpack.c.l.b16 %v151
    %v191 = vunpack.c.l.b16 %v152
    %v192 = vunpack.c.l.b16 %v153
    %v193 = vunpack.c.l.b16 %v154
    %v194 = vunpack.c.l.b16 %v155
    %v195 = vunpack.c.l.b16 %v156
    %v196 = vunpack.c.l.b16 %v157
    %v197 = vunpack.c.l.b16 %v158
    %v198 = vunpack.c.l.b16 %v159
    %v199 = vunpack.c.l.b16 %v160
    %v200 = vunpack.c.l.b16 %v161
    %v201 = vunpack.c.l.b16 %v162
    %v202 = vunpack.c.l.b16 %v163
    %v203 = vunpack.c.l.b16 %v164
    %v204 = vpack.c.b16 %v189, %v188
    %v205 = vpack.c.b16 %v191, %v190
    %v206 = vpack.c.b16 %v193, %v192
    %v207 = vpack.c.b16 %v195, %v194
    %v208 = vpack.c.b16 %v197, %v196
    %v209 = vpack.c.b16 %v199, %v198
    %v210 = vpack.c.b16 %v201, %v200
    %v211 = vpack.c.b16 %v203, %v202
    %220 = vmatprep.subr.bf16.mxu0 0
    %221 = vmatpush1.bf16.msra.mxu0 %v211
    %222 = vmatprep.subr.bf16.mxu0 0
    %223 = vmatpush1.bf16.msra.mxu0 %v210
    %224 = vmatprep.subr.bf16.mxu0 0
    %225 = vmatpush1.bf16.msra.mxu0 %v209
    %226 = vmatprep.subr.bf16.mxu0 0
    %227 = vmatpush1.bf16.msra.mxu0 %v208
    %228 = vmatprep.subr.bf16.mxu0 0
    %229 = vmatpush1.bf16.msra.mxu0 %v207
    %230 = vmatprep.subr.bf16.mxu0 0
    %231 = vmatpush1.bf16.msra.mxu0 %v206
    %232 = vmatprep.subr.bf16.mxu0 0
    %233 = vmatpush1.bf16.msra.mxu0 %v205
    %234 = vmatprep.subr.bf16.mxu0 0
    %235 = vmatpush1.bf16.msra.mxu0 %v204
    %236 = vmatprep.subr.bf16.mxu0 0
    %237 = vmatpush2.bf16.msra.mxu0 0
    %238 = vmatprep.subr.bf16.mxu0 0
    %239 = vmatpush2.bf16.msra.mxu0 0
    %240 = vmatprep.subr.bf16.mxu0 0
    %241 = vmatpush2.bf16.msra.mxu0 0
    %242 = vmatprep.subr.bf16.mxu0 0
    %243 = vmatpush2.bf16.msra.mxu0 0
    %244 = vmatprep.subr.bf16.mxu0 0
    %245 = vmatpush2.bf16.msra.mxu0 0
    %246 = vmatprep.subr.bf16.mxu0 0
    %247 = vmatpush2.bf16.msra.mxu0 0
    %248 = vmatprep.subr.bf16.mxu0 0
    %249 = vmatpush2.bf16.msra.mxu0 0
    %250 = vmatprep.subr.bf16.mxu0 0
    %251 = vmatpush2.bf16.msra.mxu0 0
    %252 = vmatprep.mubr.bf16.mxu0 0
    %253 = vmatmul.mubr.bf16.gmra.mxu0 %v148
    %v254 = vpop.f32.mrf.mxu0
    %v255 = vadd.f32 %v170, %v254
    %v256 = vpop.f32.mrf.mxu0
    %v257 = vpop.f32.mrf.mxu0
    %v258 = vadd.f32 %v170, %v257
    %v259 = vpop.f32.mrf.mxu0
    %260 = vdwg.mxu0
    %v261 = vmax.f32 %v255, 0.0
    %v262 = vmax.f32 %v258, 0.0
    %v263 = vpack.c.bf16 %v262, %v261
    %v264 = vld [vmem:[#allocation8] sm:$0xff]
    %v265 = vld [vmem:[#allocation8 + $0x8] sm:$0xff]
    %v266 = vld [vmem:[#allocation8 + $0x10] sm:$0xff]
    %v267 = vld [vmem:[#allocation8 + $0x18] sm:$0xff]
    %v268 = vld [vmem:[#allocation8 + $0x20] sm:$0xff]
    %v269 = vld [vmem:[#allocation8 + $0x28] sm:$0xff]
    %v270 = vld [vmem:[#allocation8 + $0x30] sm:$0xff]
    %v271 = vld [vmem:[#allocation8 + $0x38] sm:$0xff]
    %v272 = vld [vmem:[#allocation8 + $0x40] sm:$0xff]
    %v273 = vld [vmem:[#allocation8 + $0x48] sm:$0xff]
    %v274 = vld [vmem:[#allocation8 + $0x50] sm:$0xff]
    %v275 = vld [vmem:[#allocation8 + $0x58] sm:$0xff]
    %v276 = vld [vmem:[#allocation8 + $0x60] sm:$0xff]
    %v277 = vld [vmem:[#allocation8 + $0x68] sm:$0xff]
    %v278 = vld [vmem:[#allocation8 + $0x70] sm:$0xff]
    %v279 = vld [vmem:[#allocation8 + $0x78] sm:$0xff]
    %v280 = vld [vmem:[%s6] sm:$0x3]
    %v282 = vlaneseq
    %v283 = vshrl.u32 %v282, 7
    %v284 = vsub.s32 0, %v283
    %v285 = vrot.slane %v280, %v284
    %v286 = vlaneseq
    %v287 = vshrl.u32 %v286, 7
    %v288 = vsub.s32 1, %v287
    %v289 = vrot.slane %v280, %v288
    %v308 = vunpack.c.l.b16 %v264
    %v309 = vunpack.c.h.b16 %v264
    %v310 = vunpack.c.l.b16 %v265
    %v311 = vunpack.c.h.b16 %v265
    %v312 = vunpack.c.l.b16 %v266
    %v313 = vunpack.c.h.b16 %v266
    %v314 = vunpack.c.l.b16 %v267
    %v315 = vunpack.c.h.b16 %v267
    %v316 = vunpack.c.l.b16 %v268
    %v317 = vunpack.c.h.b16 %v268
    %v318 = vunpack.c.l.b16 %v269
    %v319 = vunpack.c.h.b16 %v269
    %v320 = vunpack.c.l.b16 %v270
    %v321 = vunpack.c.h.b16 %v270
    %v322 = vunpack.c.l.b16 %v271
    %v323 = vunpack.c.h.b16 %v271
    %v324 = vunpack.c.l.b16 %v272
    %v325 = vunpack.c.h.b16 %v272
    %v326 = vunpack.c.l.b16 %v273
    %v327 = vunpack.c.h.b16 %v273
    %v328 = vunpack.c.l.b16 %v274
    %v329 = vunpack.c.h.b16 %v274
    %v330 = vunpack.c.l.b16 %v275
    %v331 = vunpack.c.h.b16 %v275
    %v332 = vunpack.c.l.b16 %v276
    %v333 = vunpack.c.h.b16 %v276
    %v334 = vunpack.c.l.b16 %v277
    %v335 = vunpack.c.h.b16 %v277
    %v336 = vunpack.c.l.b16 %v278
    %v337 = vunpack.c.h.b16 %v278
    %v338 = vunpack.c.l.b16 %v279
    %v339 = vunpack.c.h.b16 %v279
    %v340 = vpack.c.b16 %v310, %v308
    %v341 = vpack.c.b16 %v311, %v309
    %v342 = vpack.c.b16 %v314, %v312
    %v343 = vpack.c.b16 %v315, %v313
    %v344 = vpack.c.b16 %v318, %v316
    %v345 = vpack.c.b16 %v319, %v317
    %v346 = vpack.c.b16 %v322, %v320
    %v347 = vpack.c.b16 %v323, %v321
    %v348 = vpack.c.b16 %v326, %v324
    %v349 = vpack.c.b16 %v327, %v325
    %v350 = vpack.c.b16 %v330, %v328
    %v351 = vpack.c.b16 %v331, %v329
    %v352 = vpack.c.b16 %v334, %v332
    %v353 = vpack.c.b16 %v335, %v333
    %v354 = vpack.c.b16 %v338, %v336
    %v355 = vpack.c.b16 %v339, %v337
    %372 = vmatprep.subr.bf16.mxu0 %v355
    %373 = vmatpush1.bf16.msra.mxu0 %v354
    %374 = vmatprep.subr.bf16.mxu0 %v353
    %375 = vmatpush1.bf16.msra.mxu0 %v352
    %376 = vmatprep.subr.bf16.mxu0 %v351
    %377 = vmatpush1.bf16.msra.mxu0 %v350
    %378 = vmatprep.subr.bf16.mxu0 %v349
    %379 = vmatpush1.bf16.msra.mxu0 %v348
    %380 = vmatprep.subr.bf16.mxu0 %v347
    %381 = vmatpush1.bf16.msra.mxu0 %v346
    %382 = vmatprep.subr.bf16.mxu0 %v345
    %383 = vmatpush1.bf16.msra.mxu0 %v344
    %384 = vmatprep.subr.bf16.mxu0 %v343
    %385 = vmatpush1.bf16.msra.mxu0 %v342
    %386 = vmatprep.subr.bf16.mxu0 %v341
    %387 = vmatpush1.bf16.msra.mxu0 %v340
    %388 = vmatprep.subr.bf16.mxu0 0
    %389 = vmatpush2.bf16.msra.mxu0 0
    %390 = vmatprep.subr.bf16.mxu0 0
    %391 = vmatpush2.bf16.msra.mxu0 0
    %392 = vmatprep.subr.bf16.mxu0 0
    %393 = vmatpush2.bf16.msra.mxu0 0
    %394 = vmatprep.subr.bf16.mxu0 0
    %395 = vmatpush2.bf16.msra.mxu0 0
    %396 = vmatprep.subr.bf16.mxu0 0
    %397 = vmatpush2.bf16.msra.mxu0 0
    %398 = vmatprep.subr.bf16.mxu0 0
    %399 = vmatpush2.bf16.msra.mxu0 0
    %400 = vmatprep.subr.bf16.mxu0 0
    %401 = vmatpush2.bf16.msra.mxu0 0
    %402 = vmatprep.subr.bf16.mxu0 0
    %403 = vmatpush2.bf16.msra.mxu0 0
    %404 = vmatprep.mubr.bf16.mxu0 0
    %405 = vmatmul.mubr.bf16.gmra.mxu0 %v263
    %v406 = vpop.f32.mrf.mxu0
    %v407 = vadd.f32 %v285, %v406
    %v408 = vpop.f32.mrf.mxu0
    %v409 = vadd.f32 %v289, %v408
    %v410 = vpop.f32.mrf.mxu0
    %v411 = vadd.f32 %v285, %v410
    %v412 = vpop.f32.mrf.mxu0
    %v413 = vadd.f32 %v289, %v412
    %414 = vdwg.mxu0
    %v415 = vtanh.pop %v407
    %v416 = vtanh.pop %v411
    %417 = vst [vmem:[#allocation10] sm:$0xff] %v415
    %418 = vst [vmem:[#allocation10 + $0x10] sm:$0xff] %v416
    %419 = vst [vmem:[#allocation10 + $0x8] sm:$0xff] %v409
    %420 = vst [vmem:[#allocation10 + $0x18] sm:$0xff] %v413
    // Predicated region
    $region46: #{tpu_custom_call.1} parent=1 // pred_check
      _
    $region47: #{tpu_custom_call.1} parent=1 // pred_check_branch
      %422 = sbr.rel (0) target = $region49
    $region48: #{tpu_custom_call.1} parent=1 // pred_region
      %s424 = ssub.s32 512, 512
      %425 = vsyncadd [#allocation4], %s424
      %s426 = sshll.u32 [#allocation10], 4
      %s427 = int_to_ptr.vmem [resolvable:$true] %s426
      %432 = dma.vmem_to_hbm [thread:$0]  %s427, 512, %s7, [#allocation4], 256, 256, 16
    $region49: #{tpu_custom_call.1} parent=1 // pred_fallthru
      _
    // Predicated region
    $region50: #{tpu_custom_call.1} parent=1 // pred_check
      _
    $region51: #{tpu_custom_call.1} parent=1 // pred_check_branch
      %434 = sbr.rel (0) target = $region53
    $region52: #{tpu_custom_call.1} parent=1 // pred_region
      %435 = dma.done [#allocation4], 512
    $region53: #{tpu_custom_call.1} parent=1 // pred_fallthru
      _
    %436 = vsyncpa [#allocation3], 1
    %437 = vsyncpa [#allocation6], 1
    %438 = vsyncpa [#allocation9], 1
    %439 = vsyncpa [#allocation4], 1

// kernel: tpu_custom_call.1
$region0: #{tpu_custom_call.1}
  #allocation0 [shape = 'u32[]', space=smem, size = 0x4, offset = 0x4, fixed_abs, tag = 'smem constant byte address 0x4 - core index']
  #allocation1 [shape = 'u32[144,128]{1,0:T(1,128)}', space=vmem, size = 0x12000, scoped, tag = 'internal scratch']
  %s0 = inlined_call_operand.hbm [shape: f32[16,16], index: 0, kind: input, shape index: {}]
  %s1 = inlined_call_operand.hbm [shape: bf16[16,128], index: 1, kind: input, shape index: {}]
  %s2 = inlined_call_operand.vmem [shape: f32[1,128], index: 2, kind: input, shape index: {}]
  %s3 = inlined_call_operand.hbm [shape: bf16[128,128], index: 3, kind: input, shape index: {}]
  %s4 = inlined_call_operand.vmem [shape: f32[1,128], index: 4, kind: input, shape index: {}]
  %s5 = inlined_call_operand.hbm [shape: bf16[128,256], index: 5, kind: input, shape index: {}]
  %s6 = inlined_call_operand.vmem [shape: f32[1,256], index: 6, kind: input, shape index: {}]
  %s7 = inlined_call_operand.hbm [shape: f32[16,256], index: 7, kind: output, shape index: {}]
  %s8 = sld [smem:[#allocation0]]
  $region54: #{tpu_custom_call.1} parent=0
    _
  %s10 = ssub.s32 1, %s8
  %s11 = scalar_select 0, %s10, %s8
  $region1: #{tpu_custom_call.1} parent=0
    #allocation2 [shape = 'u8[8192]{0}', space=vmem, size = 0x2000, scoped, tag = 'input window, operand 0, single buffered']
    #allocation3 [shape = 's32[1]{0}', space=sflag, size = 0x4, scoped, tag = 'scoped memory for tpu_custom_call.1']
    #allocation4 [shape = 's32[1]{0}', space=sflag, size = 0x4, scoped, tag = 'scoped memory for tpu_custom_call.1']
    #allocation5 [shape = 'u8[4096]{0}', space=vmem, size = 0x1000, scoped, tag = 'input window, operand 1, single buffered']
    #allocation6 [shape = 's32[1]{0}', space=sflag, size = 0x4, scoped, tag = 'scoped memory for tpu_custom_call.1']
    #allocation7 [shape = 'u8[32768]{0}', space=vmem, size = 0x8000, scoped, tag = 'input window, operand 3, single buffered']
    #allocation8 [shape = 'u8[65536]{0}', space=vmem, size = 0x10000, scoped, tag = 'input window, operand 5, single buffered']
    #allocation9 [shape = 's32[1]{0}', space=sflag, size = 0x4, scoped, tag = 'scoped memory for tpu_custom_call.1']
    #allocation10 [shape = 'u8[16384]{0}', space=vmem, size = 0x4000, scoped, tag = 'output window, operand 0, single buffered']
    %12 = vsyncpa [#allocation3], 0
    %13 = vsyncpa [#allocation6], 0
    %14 = vsyncpa [#allocation9], 0
    %15 = vsyncpa [#allocation4], 0
    // Predicated region
    $region2: #{tpu_custom_call.1} parent=1 // pred_check
      _
    $region3: #{tpu_custom_call.1} parent=1 // pred_check_branch
      %17 = sbr.rel (0) target = $region5
    $region4: #{tpu_custom_call.1} parent=1 // pred_region
      %s19 = ssub.s32 256, 256
      %20 = vsyncadd [#allocation3], %s19
      %s21 = sshll.u32 [#allocation2], 4
      %s22 = int_to_ptr.vmem [resolvable:$true] %s21
      %27 = dma.hbm_to_vmem [thread:$0]  %s0, 256, %s22, [#allocation3], 128, 128, 8
    $region5: #{tpu_custom_call.1} parent=1 // pred_fallthru
      _
    // Predicated region
    $region6: #{tpu_custom_call.1} parent=1 // pred_check
      _
    $region7: #{tpu_custom_call.1} parent=1 // pred_check_branch
      %29 = sbr.rel (0) target = $region9
    $region8: #{tpu_custom_call.1} parent=1 // pred_region
      %s31 = ssub.s32 128, 128
      %32 = vsyncadd [#allocation6], %s31
      %s33 = sshll.u32 [#allocation5], 4
      %s34 = int_to_ptr.vmem [resolvable:$true] %s33
      %39 = dma.hbm_to_vmem [thread:$0]  %s1, 128, %s34, [#allocation6], 64, 64, 4
    $region9: #{tpu_custom_call.1} parent=1 // pred_fallthru
      _
    // Predicated region
    $region10: #{tpu_custom_call.1} parent=1 // pred_check
      _
    $region11: #{tpu_custom_call.1} parent=1 // pred_check_branch
      %41 = sbr.rel (0) target = $region13
    $region12: #{tpu_custom_call.1} parent=1 // pred_region
      _
    $region13: #{tpu_custom_call.1} parent=1 // pred_fallthru
      _
    // Predicated region
    $region14: #{tpu_custom_call.1} parent=1 // pred_check
      _
    $region15: #{tpu_custom_call.1} parent=1 // pred_check_branch
      %43 = sbr.rel (0) target = $region17
    $region16: #{tpu_custom_call.1} parent=1 // pred_region
      %s45 = ssub.s32 1024, 1024
      %46 = vsyncadd [#allocation6], %s45
      %s47 = sshll.u32 [#allocation7], 4
      %s48 = int_to_ptr.vmem [resolvable:$true] %s47
      %53 = dma.hbm_to_vmem [thread:$0]  %s3, 1024, %s48, [#allocation6], 64, 64, 4
    $region17: #{tpu_custom_call.1} parent=1 // pred_fallthru
      _
    // Predicated region
    $region18: #{tpu_custom_call.1} parent=1 // pred_check
      _
    $region19: #{tpu_custom_call.1} parent=1 // pred_check_branch
      %55 = sbr.rel (0) target = $region21
    $region20: #{tpu_custom_call.1} parent=1 // pred_region
      _
    $region21: #{tpu_custom_call.1} parent=1 // pred_fallthru
      _
    // Predicated region
    $region22: #{tpu_custom_call.1} parent=1 // pred_check
      _
    $region23: #{tpu_custom_call.1} parent=1 // pred_check_branch
      %57 = sbr.rel (0) target = $region25
    $region24: #{tpu_custom_call.1} parent=1 // pred_region
      %s59 = ssub.s32 2048, 2048
      %60 = vsyncadd [#allocation9], %s59
      %s61 = sshll.u32 [#allocation8], 4
      %s62 = int_to_ptr.vmem [resolvable:$true] %s61
      %67 = dma.hbm_to_vmem [thread:$0]  %s5, 2048, %s62, [#allocation9], 128, 128, 8
    $region25: #{tpu_custom_call.1} parent=1 // pred_fallthru
      _
    // Predicated region
    $region26: #{tpu_custom_call.1} parent=1 // pred_check
      _
    $region27: #{tpu_custom_call.1} parent=1 // pred_check_branch
      %69 = sbr.rel (0) target = $region29
    $region28: #{tpu_custom_call.1} parent=1 // pred_region
      _
    $region29: #{tpu_custom_call.1} parent=1 // pred_fallthru
      _
    // Predicated region
    $region30: #{tpu_custom_call.1} parent=1 // pred_check
      _
    $region31: #{tpu_custom_call.1} parent=1 // pred_check_branch
      %71 = sbr.rel (0) target = $region33
    $region32: #{tpu_custom_call.1} parent=1 // pred_region
      %72 = dma.done [#allocation3], 256
    $region33: #{tpu_custom_call.1} parent=1 // pred_fallthru
      _
    // Predicated region
    $region34: #{tpu_custom_call.1} parent=1 // pred_check
      _
    $region35: #{tpu_custom_call.1} parent=1 // pred_check_branch
      %74 = sbr.rel (0) target = $region37
    $region36: #{tpu_custom_call.1} parent=1 // pred_region
      %75 = dma.done [#allocation6], 128
    $region37: #{tpu_custom_call.1} parent=1 // pred_fallthru
      _
    // Predicated region
    $region38: #{tpu_custom_call.1} parent=1 // pred_check
      _
    $region39: #{tpu_custom_call.1} parent=1 // pred_check_branch
      %77 = sbr.rel (0) target = $region41
    $region40: #{tpu_custom_call.1} parent=1 // pred_region
      %78 = dma.done [#allocation6], 1024
    $region41: #{tpu_custom_call.1} parent=1 // pred_fallthru
      _
    // Predicated region
    $region42: #{tpu_custom_call.1} parent=1 // pred_check
      _
    $region43: #{tpu_custom_call.1} parent=1 // pred_check_branch
      %80 = sbr.rel (0) target = $region45
    $region44: #{tpu_custom_call.1} parent=1 // pred_region
      %81 = dma.done [#allocation9], 2048
    $region45: #{tpu_custom_call.1} parent=1 // pred_fallthru
      _
    %v83 = vld [vmem:[#allocation2] sm:$0xff]
    %v84 = vld [vmem:[#allocation2 + $0x8] sm:$0xff]
    %v85 = vpack.c.bf16 %v84, %v83
    %v86 = vld [vmem:[#allocation5] sm:$0xf]
    %v87 = vld [vmem:[#allocation5 + $0x4] sm:$0xf]
    %v88 = vld [vmem:[%s2] sm:$0x1]
    %v90 = vlaneseq
    %v91 = vshrl.u32 %v90, 7
    %v92 = vsub.s32 0, %v91
    %v93 = vrot.slane %v88, %v92
    %v97 = vunpack.c.l.b16 %v86
    %v98 = vunpack.c.l.b16 %v87
    %v99 = vpack.c.b16 %v98, %v97
    %vm101 = vcmask 130048
    %v103 = vsel %vm101, %v85, 0
    %105 = vmatprep.subr.bf16.mxu0 0
    %106 = vmatpush1.bf16.msra.mxu0 0
    %107 = vmatprep.subr.bf16.mxu0 0
    %108 = vmatpush1.bf16.msra.mxu0 0
    %109 = vmatprep.subr.bf16.mxu0 0
    %110 = vmatpush1.bf16.msra.mxu0 0
    %111 = vmatprep.subr.bf16.mxu0 0
    %112 = vmatpush1.bf16.msra.mxu0 0
    %113 = vmatprep.subr.bf16.mxu0 0
    %114 = vmatpush1.bf16.msra.mxu0 0
    %115 = vmatprep.subr.bf16.mxu0 0
    %116 = vmatpush1.bf16.msra.mxu0 0
    %117 = vmatprep.subr.bf16.mxu0 0
    %118 = vmatpush1.bf16.msra.mxu0 0
    %119 = vmatprep.subr.bf16.mxu0 0
    %120 = vmatpush1.bf16.msra.mxu0 %v99
    %121 = vmatprep.subr.bf16.mxu0 0
    %122 = vmatpush2.bf16.msra.mxu0 0
    %123 = vmatprep.subr.bf16.mxu0 0
    %124 = vmatpush2.bf16.msra.mxu0 0
    %125 = vmatprep.subr.bf16.mxu0 0
    %126 = vmatpush2.bf16.msra.mxu0 0
    %127 = vmatprep.subr.bf16.mxu0 0
    %128 = vmatpush2.bf16.msra.mxu0 0
    %129 = vmatprep.subr.bf16.mxu0 0
    %130 = vmatpush2.bf16.msra.mxu0 0
    %131 = vmatprep.subr.bf16.mxu0 0
    %132 = vmatpush2.bf16.msra.mxu0 0
    %133 = vmatprep.subr.bf16.mxu0 0
    %134 = vmatpush2.bf16.msra.mxu0 0
    %135 = vmatprep.subr.bf16.mxu0 0
    %136 = vmatpush2.bf16.msra.mxu0 0
    %137 = vmatprep.mubr.bf16.mxu0 0
    %138 = vmatmul.mubr.bf16.gmra.mxu0 %v103
    %v139 = vpop.f32.mrf.mxu0
    %v140 = vadd.f32 %v93, %v139
    %v141 = vpop.f32.mrf.mxu0
    %v142 = vpop.f32.mrf.mxu0
    %v143 = vadd.f32 %v93, %v142
    %v144 = vpop.f32.mrf.mxu0
    %145 = vdwg.mxu0
    %v146 = vmax.f32 %v140, 0.0
    %v147 = vmax.f32 %v143, 0.0
    %v148 = vpack.c.bf16 %v147, %v146
    %v149 = vld [vmem:[#allocation7] sm:$0xf]
    %v150 = vld [vmem:[#allocation7 + $0x4] sm:$0xf]
    %v151 = vld [vmem:[#allocation7 + $0x8] sm:$0xf]
    %v152 = vld [vmem:[#allocation7 + $0xc] sm:$0xf]
    %v153 = vld [vmem:[#allocation7 + $0x10] sm:$0xf]
    %v154 = vld [vmem:[#allocation7 + $0x14] sm:$0xf]
    %v155 = vld [vmem:[#allocation7 + $0x18] sm:$0xf]
    %v156 = vld [vmem:[#allocation7 + $0x1c] sm:$0xf]
    %v157 = vld [vmem:[#allocation7 + $0x20] sm:$0xf]
    %v158 = vld [vmem:[#allocation7 + $0x24] sm:$0xf]
    %v159 = vld [vmem:[#allocation7 + $0x28] sm:$0xf]
    %v160 = vld [vmem:[#allocation7 + $0x2c] sm:$0xf]
    %v161 = vld [vmem:[#allocation7 + $0x30] sm:$0xf]
    %v162 = vld [vmem:[#allocation7 + $0x34] sm:$0xf]
    %v163 = vld [vmem:[#allocation7 + $0x38] sm:$0xf]
    %v164 = vld [vmem:[#allocation7 + $0x3c] sm:$0xf]
    %v165 = vld [vmem:[%s4] sm:$0x1]
    %v167 = vlaneseq
    %v168 = vshrl.u32 %v167, 7
    %v169 = vsub.s32 0, %v168
    %v170 = vrot.slane %v165, %v169
    %v188 = vunpack.c.l.b16 %v149
    %v189 = vunpack.c.l.b16 %v150
    %v190 = vunpack.c.l.b16 %v151
    %v191 = vunpack.c.l.b16 %v152
    %v192 = vunpack.c.l.b16 %v153
    %v193 = vunpack.c.l.b16 %v154
    %v194 = vunpack.c.l.b16 %v155
    %v195 = vunpack.c.l.b16 %v156
    %v196 = vunpack.c.l.b16 %v157
    %v197 = vunpack.c.l.b16 %v158
    %v198 = vunpack.c.l.b16 %v159
    %v199 = vunpack.c.l.b16 %v160
    %v200 = vunpack.c.l.b16 %v161
    %v201 = vunpack.c.l.b16 %v162
    %v202 = vunpack.c.l.b16 %v163
    %v203 = vunpack.c.l.b16 %v164
    %v204 = vpack.c.b16 %v189, %v188
    %v205 = vpack.c.b16 %v191, %v190
    %v206 = vpack.c.b16 %v193, %v192
    %v207 = vpack.c.b16 %v195, %v194
    %v208 = vpack.c.b16 %v197, %v196
    %v209 = vpack.c.b16 %v199, %v198
    %v210 = vpack.c.b16 %v201, %v200
    %v211 = vpack.c.b16 %v203, %v202
    %220 = vmatprep.subr.bf16.mxu0 0
    %221 = vmatpush1.bf16.msra.mxu0 %v211
    %222 = vmatprep.subr.bf16.mxu0 0
    %223 = vmatpush1.bf16.msra.mxu0 %v210
    %224 = vmatprep.subr.bf16.mxu0 0
    %225 = vmatpush1.bf16.msra.mxu0 %v209
    %226 = vmatprep.subr.bf16.mxu0 0
    %227 = vmatpush1.bf16.msra.mxu0 %v208
    %228 = vmatprep.subr.bf16.mxu0 0
    %229 = vmatpush1.bf16.msra.mxu0 %v207
    %230 = vmatprep.subr.bf16.mxu0 0
    %231 = vmatpush1.bf16.msra.mxu0 %v206
    %232 = vmatprep.subr.bf16.mxu0 0
    %233 = vmatpush1.bf16.msra.mxu0 %v205
    %234 = vmatprep.subr.bf16.mxu0 0
    %235 = vmatpush1.bf16.msra.mxu0 %v204
    %236 = vmatprep.subr.bf16.mxu0 0
    %237 = vmatpush2.bf16.msra.mxu0 0
    %238 = vmatprep.subr.bf16.mxu0 0
    %239 = vmatpush2.bf16.msra.mxu0 0
    %240 = vmatprep.subr.bf16.mxu0 0
    %241 = vmatpush2.bf16.msra.mxu0 0
    %242 = vmatprep.subr.bf16.mxu0 0
    %243 = vmatpush2.bf16.msra.mxu0 0
    %244 = vmatprep.subr.bf16.mxu0 0
    %245 = vmatpush2.bf16.msra.mxu0 0
    %246 = vmatprep.subr.bf16.mxu0 0
    %247 = vmatpush2.bf16.msra.mxu0 0
    %248 = vmatprep.subr.bf16.mxu0 0
    %249 = vmatpush2.bf16.msra.mxu0 0
    %250 = vmatprep.subr.bf16.mxu0 0
    %251 = vmatpush2.bf16.msra.mxu0 0
    %252 = vmatprep.mubr.bf16.mxu0 0
    %253 = vmatmul.mubr.bf16.gmra.mxu0 %v148
    %v254 = vpop.f32.mrf.mxu0
    %v255 = vadd.f32 %v170, %v254
    %v256 = vpop.f32.mrf.mxu0
    %v257 = vpop.f32.mrf.mxu0
    %v258 = vadd.f32 %v170, %v257
    %v259 = vpop.f32.mrf.mxu0
    %260 = vdwg.mxu0
    %v261 = vmax.f32 %v255, 0.0
    %v262 = vmax.f32 %v258, 0.0
    %v263 = vpack.c.bf16 %v262, %v261
    %v264 = vld [vmem:[#allocation8] sm:$0xff]
    %v265 = vld [vmem:[#allocation8 + $0x8] sm:$0xff]
    %v266 = vld [vmem:[#allocation8 + $0x10] sm:$0xff]
    %v267 = vld [vmem:[#allocation8 + $0x18] sm:$0xff]
    %v268 = vld [vmem:[#allocation8 + $0x20] sm:$0xff]
    %v269 = vld [vmem:[#allocation8 + $0x28] sm:$0xff]
    %v270 = vld [vmem:[#allocation8 + $0x30] sm:$0xff]
    %v271 = vld [vmem:[#allocation8 + $0x38] sm:$0xff]
    %v272 = vld [vmem:[#allocation8 + $0x40] sm:$0xff]
    %v273 = vld [vmem:[#allocation8 + $0x48] sm:$0xff]
    %v274 = vld [vmem:[#allocation8 + $0x50] sm:$0xff]
    %v275 = vld [vmem:[#allocation8 + $0x58] sm:$0xff]
    %v276 = vld [vmem:[#allocation8 + $0x60] sm:$0xff]
    %v277 = vld [vmem:[#allocation8 + $0x68] sm:$0xff]
    %v278 = vld [vmem:[#allocation8 + $0x70] sm:$0xff]
    %v279 = vld [vmem:[#allocation8 + $0x78] sm:$0xff]
    %v280 = vld [vmem:[%s6] sm:$0x3]
    %v282 = vlaneseq
    %v283 = vshrl.u32 %v282, 7
    %v284 = vsub.s32 0, %v283
    %v285 = vrot.slane %v280, %v284
    %v286 = vlaneseq
    %v287 = vshrl.u32 %v286, 7
    %v288 = vsub.s32 1, %v287
    %v289 = vrot.slane %v280, %v288
    %v308 = vunpack.c.l.b16 %v264
    %v309 = vunpack.c.h.b16 %v264
    %v310 = vunpack.c.l.b16 %v265
    %v311 = vunpack.c.h.b16 %v265
    %v312 = vunpack.c.l.b16 %v266
    %v313 = vunpack.c.h.b16 %v266
    %v314 = vunpack.c.l.b16 %v267
    %v315 = vunpack.c.h.b16 %v267
    %v316 = vunpack.c.l.b16 %v268
    %v317 = vunpack.c.h.b16 %v268
    %v318 = vunpack.c.l.b16 %v269
    %v319 = vunpack.c.h.b16 %v269
    %v320 = vunpack.c.l.b16 %v270
    %v321 = vunpack.c.h.b16 %v270
    %v322 = vunpack.c.l.b16 %v271
    %v323 = vunpack.c.h.b16 %v271
    %v324 = vunpack.c.l.b16 %v272
    %v325 = vunpack.c.h.b16 %v272
    %v326 = vunpack.c.l.b16 %v273
    %v327 = vunpack.c.h.b16 %v273
    %v328 = vunpack.c.l.b16 %v274
    %v329 = vunpack.c.h.b16 %v274
    %v330 = vunpack.c.l.b16 %v275
    %v331 = vunpack.c.h.b16 %v275
    %v332 = vunpack.c.l.b16 %v276
    %v333 = vunpack.c.h.b16 %v276
    %v334 = vunpack.c.l.b16 %v277
    %v335 = vunpack.c.h.b16 %v277
    %v336 = vunpack.c.l.b16 %v278
    %v337 = vunpack.c.h.b16 %v278
    %v338 = vunpack.c.l.b16 %v279
    %v339 = vunpack.c.h.b16 %v279
    %v340 = vpack.c.b16 %v310, %v308
    %v341 = vpack.c.b16 %v311, %v309
    %v342 = vpack.c.b16 %v314, %v312
    %v343 = vpack.c.b16 %v315, %v313
    %v344 = vpack.c.b16 %v318, %v316
    %v345 = vpack.c.b16 %v319, %v317
    %v346 = vpack.c.b16 %v322, %v320
    %v347 = vpack.c.b16 %v323, %v321
    %v348 = vpack.c.b16 %v326, %v324
    %v349 = vpack.c.b16 %v327, %v325
    %v350 = vpack.c.b16 %v330, %v328
    %v351 = vpack.c.b16 %v331, %v329
    %v352 = vpack.c.b16 %v334, %v332
    %v353 = vpack.c.b16 %v335, %v333
    %v354 = vpack.c.b16 %v338, %v336
    %v355 = vpack.c.b16 %v339, %v337
    %372 = vmatprep.subr.bf16.mxu0 %v355
    %373 = vmatpush1.bf16.msra.mxu0 %v354
    %374 = vmatprep.subr.bf16.mxu0 %v353
    %375 = vmatpush1.bf16.msra.mxu0 %v352
    %376 = vmatprep.subr.bf16.mxu0 %v351
    %377 = vmatpush1.bf16.msra.mxu0 %v350
    %378 = vmatprep.subr.bf16.mxu0 %v349
    %379 = vmatpush1.bf16.msra.mxu0 %v348
    %380 = vmatprep.subr.bf16.mxu0 %v347
    %381 = vmatpush1.bf16.msra.mxu0 %v346
    %382 = vmatprep.subr.bf16.mxu0 %v345
    %383 = vmatpush1.bf16.msra.mxu0 %v344
    %384 = vmatprep.subr.bf16.mxu0 %v343
    %385 = vmatpush1.bf16.msra.mxu0 %v342
    %386 = vmatprep.subr.bf16.mxu0 %v341
    %387 = vmatpush1.bf16.msra.mxu0 %v340
    %388 = vmatprep.subr.bf16.mxu0 0
    %389 = vmatpush2.bf16.msra.mxu0 0
    %390 = vmatprep.subr.bf16.mxu0 0
    %391 = vmatpush2.bf16.msra.mxu0 0
    %392 = vmatprep.subr.bf16.mxu0 0
    %393 = vmatpush2.bf16.msra.mxu0 0
    %394 = vmatprep.subr.bf16.mxu0 0
    %395 = vmatpush2.bf16.msra.mxu0 0
    %396 = vmatprep.subr.bf16.mxu0 0
    %397 = vmatpush2.bf16.msra.mxu0 0
    %398 = vmatprep.subr.bf16.mxu0 0
    %399 = vmatpush2.bf16.msra.mxu0 0
    %400 = vmatprep.subr.bf16.mxu0 0
    %401 = vmatpush2.bf16.msra.mxu0 0
    %402 = vmatprep.subr.bf16.mxu0 0
    %403 = vmatpush2.bf16.msra.mxu0 0
    %404 = vmatprep.mubr.bf16.mxu0 0
    %405 = vmatmul.mubr.bf16.gmra.mxu0 %v263
    %v406 = vpop.f32.mrf.mxu0
    %v407 = vadd.f32 %v285, %v406
    %v408 = vpop.f32.mrf.mxu0
    %v409 = vadd.f32 %v289, %v408
    %v410 = vpop.f32.mrf.mxu0
    %v411 = vadd.f32 %v285, %v410
    %v412 = vpop.f32.mrf.mxu0
    %v413 = vadd.f32 %v289, %v412
    %414 = vdwg.mxu0
    %v415 = vtanh.pop %v407
    %v416 = vtanh.pop %v411
    %417 = vst [vmem:[#allocation10] sm:$0xff] %v415
    %418 = vst [vmem:[#allocation10 + $0x10] sm:$0xff] %v416
    %419 = vst [vmem:[#allocation10 + $0x8] sm:$0xff] %v409
    %420 = vst [vmem:[#allocation10 + $0x18] sm:$0xff] %v413
    // Predicated region
    $region46: #{tpu_custom_call.1} parent=1 // pred_check
      _
    $region47: #{tpu_custom_call.1} parent=1 // pred_check_branch
      %422 = sbr.rel (0) target = $region49
    $region48: #{tpu_custom_call.1} parent=1 // pred_region
      %s424 = ssub.s32 512, 512
      %425 = vsyncadd [#allocation4], %s424
      %s426 = sshll.u32 [#allocation10], 4
      %s427 = int_to_ptr.vmem [resolvable:$true] %s426
      %432 = dma.vmem_to_hbm [thread:$0]  %s427, 512, %s7, [#allocation4], 256, 256, 16
    $region49: #{tpu_custom_call.1} parent=1 // pred_fallthru
      _
    // Predicated region
    $region50: #{tpu_custom_call.1} parent=1 // pred_check
      _
    $region51: #{tpu_custom_call.1} parent=1 // pred_check_branch
      %434 = sbr.rel (0) target = $region53
    $region52: #{tpu_custom_call.1} parent=1 // pred_region
      %435 = dma.done [#allocation4], 512
    $region53: #{tpu_custom_call.1} parent=1 // pred_fallthru
      _
    %436 = vsyncpa [#allocation3], 1
    %437 = vsyncpa [#allocation6], 1
    %438 = vsyncpa [#allocation9], 1
    %439 = vsyncpa [#allocation4], 1

</llo_original>
